<compile_context>
chip_gen: v7x
topology: tpu7x:2x2x1
jax: 0.10.0
libtpu: 0.0.40
codegen_flags: <defaults>
</compile_context>

<pallas_src>
import functools

import jax
import jax.numpy as jnp
from jax.experimental import pallas as pl
from jax.experimental.pallas import tpu as pltpu

SELU_ALPHA = 1.6732632423543772
SELU_SCALE = 1.0507009873554805
LANE = 128
SUBLANE = 8


def _round_up(n, m):
    return ((n + m - 1) // m) * m


def _selu_f32(y):
    # torch.selu: scale * (max(0, y) + alpha * (exp(min(0, y)) - 1))
    return SELU_SCALE * jnp.where(
        y > 0.0, y, SELU_ALPHA * (jnp.exp(jnp.minimum(y, 0.0)) - 1.0)
    )


def _mlp_fused_kernel(x_ref, *refs, n_layers):
    """Fused multi-layer Linear(+SELU). refs = (w0, b0, w1, b1, ..., out_ref)."""
    o_ref = refs[-1]
    wb = refs[:-1]
    h = x_ref[...]                                   # (tile_b, fin_pad) f32
    for i in range(n_layers):
        w = wb[2 * i][...]                           # (fin_pad, fout_pad) resident
        b = wb[2 * i + 1][...].astype(jnp.float32)   # (1, fout_pad), broadcasts
        h = jnp.dot(h.astype(w.dtype), w, preferred_element_type=jnp.float32) + b
        if i < n_layers - 1:
            h = _selu_f32(h)                         # SELU kept in f32 (VPU/EUP)
    o_ref[...] = h.astype(o_ref.dtype)


def init_mlp_params(key, size):
    """Deterministic init mimicking torch.nn.Linear (uniform +-1/sqrt(fan_in)).
    Weights returned pre-transposed as (in_features, out_features), unpadded."""
    params = []
    for i in range(len(size) - 1):
        fan_in, fan_out = size[i], size[i + 1]
        key, kw, kb = jax.random.split(key, 3)
        bound = 1.0 / jnp.sqrt(jnp.float32(fan_in))
        w_t = jax.random.uniform(
            kw, (fan_in, fan_out), jnp.float32, minval=-bound, maxval=bound
        )
        b = jax.random.uniform(
            kb, (fan_out,), jnp.float32, minval=-bound, maxval=bound
        )
        params.append((w_t, b))
    return params


def pad_mlp_params(params, param_dtype=jnp.float32):
    """One-time zero-pad of each (w_t, b) to lane-dense (multiple-of-128) dims.
    Use param_dtype=jnp.bfloat16 on v6e/v7x for bf16 MXU with f32 accumulation."""
    padded = []
    for w_t, b in params:
        fi, fo = w_t.shape
        fi_p, fo_p = _round_up(fi, LANE), _round_up(fo, LANE)
        w_p = jnp.zeros((fi_p, fo_p), param_dtype).at[:fi, :fo].set(
            w_t.astype(param_dtype)
        )
        b_p = jnp.zeros((1, fo_p), jnp.float32).at[0, :fo].set(
            b.astype(jnp.float32)
        )
        padded.append((w_p, b_p))
    return padded


@functools.partial(jax.jit, static_argnames=("n_output", "tile_b"))
def mlp_forward(x, padded_params, n_output, tile_b=128):
    """Forward pass of MLP(size, class_input=False): hidden layers SELU, last raw."""
    # dropout(x) == x  (inference / p=0.0)
    n_b, n_in = x.shape
    n_layers = len(padded_params)
    fin_pad = padded_params[0][0].shape[0]
    fout_pad = padded_params[-1][0].shape[1]

    # batch tile: multiple of 8 sublanes, no bigger than the (rounded) batch
    tile_b = _round_up(min(tile_b, _round_up(n_b, SUBLANE)), SUBLANE)
    n_b_pad = _round_up(n_b, tile_b)

    x_pad = jnp.zeros((n_b_pad, fin_pad), jnp.float32).at[:n_b, :n_in].set(
        x.astype(jnp.float32)
    )

    # flat inputs: x, w0, b0, w1, b1, ...
    flat_inputs = [x_pad]
    in_specs = [pl.BlockSpec((tile_b, fin_pad), lambda i: (i, 0))]
    for w_p, b_p in padded_params:
        flat_inputs += [w_p, b_p]
        in_specs += [
            pl.BlockSpec(w_p.shape, lambda i: (0, 0)),  # resident across grid steps
            pl.BlockSpec(b_p.shape, lambda i: (0, 0)),  # resident across grid steps
        ]

    grid = (n_b_pad // tile_b,)

    # explicit VMEM budget: double-buffered activation tiles + resident params
    param_bytes = sum(
        w.size * w.dtype.itemsize + b.size * b.dtype.itemsize
        for w, b in padded_params
    )
    act_bytes = 2 * tile_b * (fin_pad + fout_pad) * 4
    vmem_limit = int(
        min(max(4 * (param_bytes + act_bytes), 16 * 1024 * 1024), 48 * 1024 * 1024)
    )

    kernel = functools.partial(_mlp_fused_kernel, n_layers=n_layers)
    out_pad = pl.pallas_call(
        kernel,
        out_shape=jax.ShapeDtypeStruct((n_b_pad, fout_pad), jnp.float32),
        grid_spec=pltpu.PrefetchScalarGridSpec(
            num_scalar_prefetch=0,
            grid=grid,
            in_specs=in_specs,
            out_specs=pl.BlockSpec((tile_b, fout_pad), lambda i: (i, 0)),
        ),
        compiler_params=pltpu.CompilerParams(
            dimension_semantics=("parallel",),
            vmem_limit_bytes=vmem_limit,
        ),
    )(*flat_inputs)

    return out_pad[:n_b, :n_output]


def mlp_reference(x, params):
    """Pure-JAX reference (unpadded params) for validation."""
    n_layers = len(params)
    for idx, (w_t, b) in enumerate(params):
        y = x @ w_t + b
        if idx < n_layers - 1:
            y = _selu_f32(y)
        x = y
    return x


if __name__ == "__main__":
    size = [32, 64, 16]          # MLP(size=[32, 64, 16])
    n_b = 20                     # non-multiple of tile to exercise batch padding

    key = jax.random.PRNGKey(0)
    key_x, key_p = jax.random.split(key)
    x = jax.random.normal(key_x, (n_b, size[0]), dtype=jnp.float32)
    params = init_mlp_params(key_p, size)
    padded_params = pad_mlp_params(params)   # pass jnp.bfloat16 here for bf16 weights

    # tile_b=8 -> grid of 3 batch tiles (exercises the parallel grid axis)
    out = mlp_forward(x, padded_params, n_output=size[-1], tile_b=8)
    out = jax.block_until_ready(out)

    ref = mlp_reference(x, params)
    assert out.shape == (n_b, size[-1]), out.shape
    assert jnp.allclose(out, ref, atol=1e-4, rtol=1e-4), "mismatch vs reference"

    print("KERNEL_OK")
</pallas_src>

<mosaic_0001>
module attributes {stable_mosaic.version = 11 : i64} {
  func.func @_mlp_fused_kernel(%arg0: i32, %arg1: memref<8x128xf32, #tpu.memory_space<vmem>>, %arg2: memref<128x128xf32, #tpu.memory_space<vmem>>, %arg3: memref<1x128xf32, #tpu.memory_space<vmem>>, %arg4: memref<128x128xf32, #tpu.memory_space<vmem>>, %arg5: memref<1x128xf32, #tpu.memory_space<vmem>>, %arg6: memref<8x128xf32, #tpu.memory_space<vmem>>) attributes {dimension_semantics = [#tpu.dimension_semantics<parallel>], iteration_bounds = array<i64: 3>, scalar_prefetch = 0 : i64, scratch_operands = 0 : i64, tpu.core_type = #tpu.core_type<tc>, window_params = [{transform_indices = @transform_0, window_bounds = array<i64: 8, 128>}, {pipeline_mode = #tpu.pipeline_mode<synchronous>, transform_indices = @transform_1, window_bounds = array<i64: 128, 128>}, {pipeline_mode = #tpu.pipeline_mode<synchronous>, transform_indices = @transform_2, window_bounds = array<i64: 1, 128>}, {pipeline_mode = #tpu.pipeline_mode<synchronous>, transform_indices = @transform_3, window_bounds = array<i64: 128, 128>}, {pipeline_mode = #tpu.pipeline_mode<synchronous>, transform_indices = @transform_4, window_bounds = array<i64: 1, 128>}, {transform_indices = @transform_5, window_bounds = array<i64: 8, 128>}]} {
    %c0 = arith.constant 0 : index
    %c0_0 = arith.constant 0 : index
    %0 = vector.load %arg1[%c0, %c0_0] : memref<8x128xf32, #tpu.memory_space<vmem>>, vector<8x128xf32>
    %c0_1 = arith.constant 0 : index
    %c0_2 = arith.constant 0 : index
    %1 = vector.load %arg2[%c0_1, %c0_2] : memref<128x128xf32, #tpu.memory_space<vmem>>, vector<128x128xf32>
    %c0_3 = arith.constant 0 : index
    %c0_4 = arith.constant 0 : index
    %2 = vector.load %arg3[%c0_3, %c0_4] : memref<1x128xf32, #tpu.memory_space<vmem>>, vector<1x128xf32>
    %cst = arith.constant dense<0.000000e+00> : vector<8x128xf32>
    %3 = tpu.matmul %0, %1, %cst {dimension_numbers = #tpu.dot_dimension_numbers<[1], [0], [0], [1], [0, 0, 1, 1], [], []>} : vector<8x128xf32>, vector<128x128xf32>, vector<8x128xf32> -> vector<8x128xf32>
    %4 = vector.broadcast %2 : vector<1x128xf32> to vector<8x128xf32>
    %5 = arith.addf %3, %4 : vector<8x128xf32>
    %cst_5 = arith.constant 0.000000e+00 : f32
    %6 = vector.broadcast %cst_5 : f32 to vector<8x128xf32>
    %7 = arith.cmpf ogt, %5, %6 : vector<8x128xf32>
    %cst_6 = arith.constant 0.000000e+00 : f32
    %8 = vector.broadcast %cst_6 : f32 to vector<8x128xf32>
    %9 = arith.minimumf %5, %8 : vector<8x128xf32>
    %10 = math.exp %9 : vector<8x128xf32>
    %cst_7 = arith.constant 1.000000e+00 : f32
    %11 = vector.broadcast %cst_7 : f32 to vector<8x128xf32>
    %12 = arith.subf %10, %11 : vector<8x128xf32>
    %cst_8 = arith.constant 1.67326319 : f32
    %13 = vector.broadcast %cst_8 : f32 to vector<8x128xf32>
    %14 = arith.mulf %13, %12 : vector<8x128xf32>
    %15 = arith.select %7, %5, %14 : vector<8x128xi1>, vector<8x128xf32>
    %cst_9 = arith.constant 1.05070102 : f32
    %16 = vector.broadcast %cst_9 : f32 to vector<8x128xf32>
    %17 = arith.mulf %16, %15 : vector<8x128xf32>
    %c0_10 = arith.constant 0 : index
    %c0_11 = arith.constant 0 : index
    %18 = vector.load %arg4[%c0_10, %c0_11] : memref<128x128xf32, #tpu.memory_space<vmem>>, vector<128x128xf32>
    %c0_12 = arith.constant 0 : index
    %c0_13 = arith.constant 0 : index
    %19 = vector.load %arg5[%c0_12, %c0_13] : memref<1x128xf32, #tpu.memory_space<vmem>>, vector<1x128xf32>
    %cst_14 = arith.constant dense<0.000000e+00> : vector<8x128xf32>
    %20 = tpu.matmul %17, %18, %cst_14 {dimension_numbers = #tpu.dot_dimension_numbers<[1], [0], [0], [1], [0, 0, 1, 1], [], []>} : vector<8x128xf32>, vector<128x128xf32>, vector<8x128xf32> -> vector<8x128xf32>
    %21 = vector.broadcast %19 : vector<1x128xf32> to vector<8x128xf32>
    %22 = arith.addf %20, %21 : vector<8x128xf32>
    %c0_15 = arith.constant 0 : index
    %c0_16 = arith.constant 0 : index
    %23 = vector.load %arg6[%c0_15, %c0_16] : memref<8x128xf32, #tpu.memory_space<vmem>>, vector<8x128xf32>
    tpu.vector_store %arg6[%c0_15, %c0_16], %22 {strides = array<i32>} : memref<8x128xf32, #tpu.memory_space<vmem>>, vector<8x128xf32>,
    return
  }
  func.func @transform_0(%arg0: i32) -> (i32, i32) {
    %c0_i32 = arith.constant 0 : i32
    %c0_i32_0 = arith.constant 0 : i32
    return %arg0, %c0_i32 : i32, i32
  }
  func.func @transform_1(%arg0: i32) -> (i32, i32) {
    %c0_i32 = arith.constant 0 : i32
    %c0_i32_0 = arith.constant 0 : i32
    %c0_i32_1 = arith.constant 0 : i32
    return %c0_i32, %c0_i32_0 : i32, i32
  }
  func.func @transform_2(%arg0: i32) -> (i32, i32) {
    %c0_i32 = arith.constant 0 : i32
    %c0_i32_0 = arith.constant 0 : i32
    %c0_i32_1 = arith.constant 0 : i32
    return %c0_i32, %c0_i32_0 : i32, i32
  }
  func.func @transform_3(%arg0: i32) -> (i32, i32) {
    %c0_i32 = arith.constant 0 : i32
    %c0_i32_0 = arith.constant 0 : i32
    %c0_i32_1 = arith.constant 0 : i32
    return %c0_i32, %c0_i32_0 : i32, i32
  }
  func.func @transform_4(%arg0: i32) -> (i32, i32) {
    %c0_i32 = arith.constant 0 : i32
    %c0_i32_0 = arith.constant 0 : i32
    %c0_i32_1 = arith.constant 0 : i32
    return %c0_i32, %c0_i32_0 : i32, i32
  }
  func.func @transform_5(%arg0: i32) -> (i32, i32) {
    %c0_i32 = arith.constant 0 : i32
    %c0_i32_0 = arith.constant 0 : i32
    return %arg0, %c0_i32 : i32, i32
  }
}

</mosaic_0001>

<llo_original>
// kernel: mlp_forward.1
$region0: #{mlp_forward.1}
  #allocation0 [shape = 'u32[]', space=smem, size = 0x4, offset = 0x4, fixed_abs, tag = 'smem constant byte address 0x4 - core index']
  #allocation1 [shape = 'u32[144,128]{1,0:T(1,128)}', space=vmem, size = 0x12000, scoped, tag = 'internal scratch']
  %s0 = inlined_call_operand.vmem [shape: f32[24,128], index: 0, kind: input, shape index: {}]
  %s1 = inlined_call_operand.hbm [shape: f32[128,128], index: 1, kind: input, shape index: {}]
  %s2 = inlined_call_operand.vmem [shape: f32[1,128], index: 2, kind: input, shape index: {}]
  %s3 = inlined_call_operand.hbm [shape: f32[128,128], index: 3, kind: input, shape index: {}]
  %s4 = inlined_call_operand.vmem [shape: f32[1,128], index: 4, kind: input, shape index: {}]
  %s5 = inlined_call_operand.vmem [shape: f32[24,128], index: 5, kind: output, shape index: {}]
  %s6 = sld [smem:[#allocation0]]
  $region61: #{mlp_forward.1} parent=0
    _
  %s8 = ssub.s32 1, %s6
  %s9 = scalar_select 0, %s8, %s6
  $region1: #{mlp_forward.1} parent=0
    #allocation2 [shape = 'u8[65536]{0}', space=vmem, size = 0x10000, scoped, tag = 'input window, operand 1, single buffered']
    #allocation3 [shape = 's32[2]{0}', space=sflag, size = 0x8, scoped, tag = 'scoped memory for mlp_forward.1']
    #allocation4 [shape = 'u8[65536]{0}', space=vmem, size = 0x10000, scoped, tag = 'input window, operand 3, single buffered']
    #allocation5 [shape = 's32[1]{0}', space=sflag, size = 0x4, scoped, tag = 'scoped memory for mlp_forward.1']
    %10 = vsyncpa [#allocation3], 0
    %11 = vsyncpa [#allocation5], 0
    loop: start=0, step=1, limit=5
    $region2: #{mlp_forward.1} parent=1 // loop_pre_header
      _
    $region3: #{mlp_forward.1} parent=1 // loop_header
      %s13 = sphi 0, %s17
      %p14 = scmp.ge.s32.totalorder %s13, 5
      %s23 = sphi 0, %s25
      %s26 = sphi 0, %s23
      %s27 = sphi 0, %s26
      %s43 = sphi 0, %s27
      %s47 = sphi 0, %s47
      %s49 = sphi 0, %s47
      %s50 = sphi 0, %s49
      %s64 = sphi 0, %s50
      %s68 = sphi 0, %s68
      %s70 = sphi 0, %s68
      %s71 = sphi 0, %s70
      %s85 = sphi 0, %s71
      %s89 = sphi 0, %s89
      %s91 = sphi 0, %s89
      %s92 = sphi 0, %s91
      %s106 = sphi 0, %s92
      %s110 = sphi 0, %s110
      %s112 = sphi 0, %s110
      %s113 = sphi 0, %s112
      %s127 = sphi 0, %s113
      %s133 = sphi 0, %s135
      %s136 = sphi 0, %s133
      %s137 = sphi 0, %s136
      %s153 = sphi 0, %s137
    $region4: #{mlp_forward.1} parent=1 // loop_header_branch
      %16 = sbr.rel (%p14) target = $region8
    $region5: #{mlp_forward.1} parent=1 // loop_body
      %s18 = ssub.s32 %s13, 1
      %s19 = ssub.s32 %s13, 2
      %s20 = sadd.s32 %s13, 1
      %s21 = ssub.s32 %s13, %s20
      %p22 = scmp.eq.s32.totalorder %s21, 0
      %s24 = sadd.s32 %s23, 1
      %s25 = scalar_select %p22, %s23, %s24
      %p28 = pneg %p22
      %p29 = scmp.eq.s32.totalorder %s13, 2
      %p30 = por %p28, %p29
      %p31 = scmp.ne.s32.totalorder %s23, %s26
      %p32 = scmp.eq.s32.totalorder %s13, 0
      %p33 = por %p31, %p32
      %p34 = scmp.ne.s32.totalorder %s23, %s26
      %p35 = scmp.eq.s32.totalorder %s18, 2
      %p36 = por %p34, %p35
      %p37 = scmp.ne.s32.totalorder %s26, %s27
      %p38 = scmp.eq.s32.totalorder %s18, 0
      %p39 = por %p37, %p38
      %p40 = scmp.ne.s32.totalorder %s26, %s27
      %p41 = scmp.eq.s32.totalorder %s19, 2
      %p42 = por %p40, %p41
      %p44 = scmp.ne.s32.totalorder %s27, %s43
      %p45 = scmp.eq.s32.totalorder %s19, 0
      %p46 = por %p44, %p45
      %s48 = sadd.s32 %s47, 1
      %p51 = scmp.eq.s32.totalorder %s13, 2
      %p52 = scmp.ne.s32.totalorder %s47, %s49
      %p53 = scmp.eq.s32.totalorder %s13, 0
      %p54 = por %p52, %p53
      %p55 = scmp.ne.s32.totalorder %s47, %s49
      %p56 = scmp.eq.s32.totalorder %s18, 2
      %p57 = por %p55, %p56
      %p58 = scmp.ne.s32.totalorder %s49, %s50
      %p59 = scmp.eq.s32.totalorder %s18, 0
      %p60 = por %p58, %p59
      %p61 = scmp.ne.s32.totalorder %s49, %s50
      %p62 = scmp.eq.s32.totalorder %s19, 2
      %p63 = por %p61, %p62
      %p65 = scmp.ne.s32.totalorder %s50, %s64
      %p66 = scmp.eq.s32.totalorder %s19, 0
      %p67 = por %p65, %p66
      %s69 = sadd.s32 %s68, 1
      %p72 = scmp.eq.s32.totalorder %s13, 2
      %p73 = scmp.ne.s32.totalorder %s68, %s70
      %p74 = scmp.eq.s32.totalorder %s13, 0
      %p75 = por %p73, %p74
      %p76 = scmp.ne.s32.totalorder %s68, %s70
      %p77 = scmp.eq.s32.totalorder %s18, 2
      %p78 = por %p76, %p77
      %p79 = scmp.ne.s32.totalorder %s70, %s71
      %p80 = scmp.eq.s32.totalorder %s18, 0
      %p81 = por %p79, %p80
      %p82 = scmp.ne.s32.totalorder %s70, %s71
      %p83 = scmp.eq.s32.totalorder %s19, 2
      %p84 = por %p82, %p83
      %p86 = scmp.ne.s32.totalorder %s71, %s85
      %p87 = scmp.eq.s32.totalorder %s19, 0
      %p88 = por %p86, %p87
      %s90 = sadd.s32 %s89, 1
      %p93 = scmp.eq.s32.totalorder %s13, 2
      %p94 = scmp.ne.s32.totalorder %s89, %s91
      %p95 = scmp.eq.s32.totalorder %s13, 0
      %p96 = por %p94, %p95
      %p97 = scmp.ne.s32.totalorder %s89, %s91
      %p98 = scmp.eq.s32.totalorder %s18, 2
      %p99 = por %p97, %p98
      %p100 = scmp.ne.s32.totalorder %s91, %s92
      %p101 = scmp.eq.s32.totalorder %s18, 0
      %p102 = por %p100, %p101
      %p103 = scmp.ne.s32.totalorder %s91, %s92
      %p104 = scmp.eq.s32.totalorder %s19, 2
      %p105 = por %p103, %p104
      %p107 = scmp.ne.s32.totalorder %s92, %s106
      %p108 = scmp.eq.s32.totalorder %s19, 0
      %p109 = por %p107, %p108
      %s111 = sadd.s32 %s110, 1
      %p114 = scmp.eq.s32.totalorder %s13, 2
      %p115 = scmp.ne.s32.totalorder %s110, %s112
      %p116 = scmp.eq.s32.totalorder %s13, 0
      %p117 = por %p115, %p116
      %p118 = scmp.ne.s32.totalorder %s110, %s112
      %p119 = scmp.eq.s32.totalorder %s18, 2
      %p120 = por %p118, %p119
      %p121 = scmp.ne.s32.totalorder %s112, %s113
      %p122 = scmp.eq.s32.totalorder %s18, 0
      %p123 = por %p121, %p122
      %p124 = scmp.ne.s32.totalorder %s112, %s113
      %p125 = scmp.eq.s32.totalorder %s19, 2
      %p126 = por %p124, %p125
      %p128 = scmp.ne.s32.totalorder %s113, %s127
      %p129 = scmp.eq.s32.totalorder %s19, 0
      %p130 = por %p128, %p129
      %s131 = ssub.s32 %s13, %s20
      %p132 = scmp.eq.s32.totalorder %s131, 0
      %s134 = sadd.s32 %s133, 1
      %s135 = scalar_select %p132, %s133, %s134
      %p138 = pneg %p132
      %p139 = scmp.eq.s32.totalorder %s13, 2
      %p140 = por %p138, %p139
      %p141 = scmp.ne.s32.totalorder %s133, %s136
      %p142 = scmp.eq.s32.totalorder %s13, 0
      %p143 = por %p141, %p142
      %p144 = scmp.ne.s32.totalorder %s133, %s136
      %p145 = scmp.eq.s32.totalorder %s18, 2
      %p146 = por %p144, %p145
      %p147 = scmp.ne.s32.totalorder %s136, %s137
      %p148 = scmp.eq.s32.totalorder %s18, 0
      %p149 = por %p147, %p148
      %p150 = scmp.ne.s32.totalorder %s136, %s137
      %p151 = scmp.eq.s32.totalorder %s19, 2
      %p152 = por %p150, %p151
      %p154 = scmp.ne.s32.totalorder %s137, %s153
      %p155 = scmp.eq.s32.totalorder %s19, 0
      %p156 = por %p154, %p155
      %p157 = scmp.le.s32.totalorder 1, %s13
      %p158 = scmp.lt.s32.totalorder %s13, 4
      %p159 = pnand %p157, %p158
      %p160 = pneg %p159
      // Predicated region
      $region9: #{mlp_forward.1} parent=5 // pred_check
        _
      $region10: #{mlp_forward.1} parent=5 // pred_check_branch
        %162 = sbr.rel (%p159) target = $region12
      $region11: #{mlp_forward.1} parent=5 // pred_region
        %s163 = ssub.s32 %s13, 1
        // Predicated region
        $region13: #{mlp_forward.1} parent=11 // pred_check
          %p164 = pneg %p60
        $region14: #{mlp_forward.1} parent=11 // pred_check_branch
          %166 = sbr.rel (%p164) target = $region16
        $region15: #{mlp_forward.1} parent=11 // pred_region
          %s168 = ssub.s32 2048, 2048
          %169 = vsyncadd [#allocation3], %s168
          %s170 = sshll.u32 [#allocation2], 4
          %s171 = int_to_ptr.vmem [resolvable:$true] %s170
          %176 = dma.hbm_to_vmem [thread:$0]  %s1, 2048, %s171, [#allocation3], 128, 128, 8
        $region16: #{mlp_forward.1} parent=11 // pred_fallthru
          _
        // Predicated region
        $region17: #{mlp_forward.1} parent=11 // pred_check
          %p177 = pneg %p81
        $region18: #{mlp_forward.1} parent=11 // pred_check_branch
          %179 = sbr.rel (%p177) target = $region20
        $region19: #{mlp_forward.1} parent=11 // pred_region
          _
        $region20: #{mlp_forward.1} parent=11 // pred_fallthru
          _
        // Predicated region
        $region21: #{mlp_forward.1} parent=11 // pred_check
          %p180 = pneg %p102
        $region22: #{mlp_forward.1} parent=11 // pred_check_branch
          %182 = sbr.rel (%p180) target = $region24
        $region23: #{mlp_forward.1} parent=11 // pred_region
          %s184 = ssub.s32 2048, 2048
          %185 = vsyncadd [#allocation5], %s184
          %s186 = sshll.u32 [#allocation4], 4
          %s187 = int_to_ptr.vmem [resolvable:$true] %s186
          %192 = dma.hbm_to_vmem [thread:$0]  %s3, 2048, %s187, [#allocation5], 128, 128, 8
        $region24: #{mlp_forward.1} parent=11 // pred_fallthru
          _
        // Predicated region
        $region25: #{mlp_forward.1} parent=11 // pred_check
          %p193 = pneg %p123
        $region26: #{mlp_forward.1} parent=11 // pred_check_branch
          %195 = sbr.rel (%p193) target = $region28
        $region27: #{mlp_forward.1} parent=11 // pred_region
          _
        $region28: #{mlp_forward.1} parent=11 // pred_fallthru
          _
      $region12: #{mlp_forward.1} parent=5 // pred_fallthru
        _
      %p196 = scmp.lt.s32.totalorder %s13, 3
      // Predicated region
      $region29: #{mlp_forward.1} parent=5 // pred_check
        %p197 = pneg %p196
      $region30: #{mlp_forward.1} parent=5 // pred_check_branch
        %199 = sbr.rel (%p197) target = $region32
      $region31: #{mlp_forward.1} parent=5 // pred_region
        // Predicated region
        $region33: #{mlp_forward.1} parent=31 // pred_check
          %p200 = pneg %p33
        $region34: #{mlp_forward.1} parent=31 // pred_check_branch
          %202 = sbr.rel (%p200) target = $region36
        $region35: #{mlp_forward.1} parent=31 // pred_region
          %p203 = scmp.lt.s32.totalorder %s13, 2
          %s204 = scalar_select %p203, %s13, 2
          %s205 = smul.addr %s204, 8
          %s206 = scalar_lea.vmem %s0, %s205
        $region36: #{mlp_forward.1} parent=31 // pred_fallthru
          _
      $region32: #{mlp_forward.1} parent=5 // pred_fallthru
        _
      %p207 = scmp.le.s32.totalorder 1, %s13
      %p208 = scmp.lt.s32.totalorder %s13, 4
      %p209 = pnand %p207, %p208
      %p210 = pneg %p209
      // Predicated region
      $region37: #{mlp_forward.1} parent=5 // pred_check
        _
      $region38: #{mlp_forward.1} parent=5 // pred_check_branch
        %212 = sbr.rel (%p209) target = $region40
      $region39: #{mlp_forward.1} parent=5 // pred_region
        %s213 = ssub.s32 %s13, 1
        // Predicated region
        $region41: #{mlp_forward.1} parent=39 // pred_check
          %p214 = pneg %p60
        $region42: #{mlp_forward.1} parent=39 // pred_check_branch
          %216 = sbr.rel (%p214) target = $region44
        $region43: #{mlp_forward.1} parent=39 // pred_region
          %217 = dma.done [#allocation3], 2048
        $region44: #{mlp_forward.1} parent=39 // pred_fallthru
          _
        // Predicated region
        $region45: #{mlp_forward.1} parent=39 // pred_check
          %p218 = pneg %p102
        $region46: #{mlp_forward.1} parent=39 // pred_check_branch
          %220 = sbr.rel (%p218) target = $region48
        $region47: #{mlp_forward.1} parent=39 // pred_region
          %221 = dma.done [#allocation5], 2048
        $region48: #{mlp_forward.1} parent=39 // pred_fallthru
          _
        %p222 = scmp.lt.s32.totalorder %s18, 2
        %s223 = scalar_select %p222, %s18, 2
        %s224 = smul.addr %s223, 8
        %s225 = scalar_lea.vmem %s0, %s224
        %p226 = pneg %p39
        %p227 = pneg %p36
        %p228 = pneg %p60
        %p229 = pneg %p57
        %p230 = pneg %p81
        %p231 = pneg %p78
        %p232 = pneg %p102
        %p233 = pneg %p99
        %p234 = pneg %p123
        %p235 = pneg %p120
        %p236 = pneg %p149
        %p237 = pneg %p146
        %p238 = scmp.lt.s32.totalorder %s18, 2
        %s239 = scalar_select %p238, %s18, 2
        %s240 = smul.addr %s239, 8
        %s241 = scalar_lea.vmem %s5, %s240
        %p242 = scmp.lt.s32.totalorder %s18, 2
        %s243 = scalar_select %p242, %s18, 2
        %s244 = smul.addr %s243, 8
        %s245 = scalar_lea.vmem %s0, %s244
        %p246 = scmp.lt.s32.totalorder %s18, 2
        %s247 = scalar_select %p246, %s18, 2
        %s248 = smul.addr %s247, 8
        %s249 = scalar_lea.vmem %s5, %s248
        %v250 = vld [vmem:[%s245] sm:$0xff]
        %v251 = vld [vmem:[#allocation2] sm:$0xff]
        %v252 = vld [vmem:[#allocation2 + $0x8] sm:$0xff]
        %v253 = vld [vmem:[#allocation2 + $0x10] sm:$0xff]
        %v254 = vld [vmem:[#allocation2 + $0x18] sm:$0xff]
        %v255 = vld [vmem:[#allocation2 + $0x20] sm:$0xff]
        %v256 = vld [vmem:[#allocation2 + $0x28] sm:$0xff]
        %v257 = vld [vmem:[#allocation2 + $0x30] sm:$0xff]
        %v258 = vld [vmem:[#allocation2 + $0x38] sm:$0xff]
        %v259 = vld [vmem:[#allocation2 + $0x40] sm:$0xff]
        %v260 = vld [vmem:[#allocation2 + $0x48] sm:$0xff]
        %v261 = vld [vmem:[#allocation2 + $0x50] sm:$0xff]
        %v262 = vld [vmem:[#allocation2 + $0x58] sm:$0xff]
        %v263 = vld [vmem:[#allocation2 + $0x60] sm:$0xff]
        %v264 = vld [vmem:[#allocation2 + $0x68] sm:$0xff]
        %v265 = vld [vmem:[#allocation2 + $0x70] sm:$0xff]
        %v266 = vld [vmem:[#allocation2 + $0x78] sm:$0xff]
        %v267 = vld [vmem:[%s2] sm:$0x1]
        %v269 = vlaneseq
        %v270 = vshrl.u32 %v269, 7
        %v271 = vsub.s32 0, %v270
        %v272 = vrot.slane %v267, %v271
        %274 = vmatprep.subr.mxu0 0.0
        %275 = vmatpush1.msra.mxu0 %v251
        %276 = vmatprep.subr.mxu0 0.0
        %277 = vmatpush1.msra.mxu0 %v252
        %278 = vmatprep.subr.mxu0 0.0
        %279 = vmatpush1.msra.mxu0 %v253
        %280 = vmatprep.subr.mxu0 0.0
        %281 = vmatpush1.msra.mxu0 %v254
        %282 = vmatprep.subr.mxu0 0.0
        %283 = vmatpush1.msra.mxu0 %v255
        %284 = vmatprep.subr.mxu0 0.0
        %285 = vmatpush1.msra.mxu0 %v256
        %286 = vmatprep.subr.mxu0 0.0
        %287 = vmatpush1.msra.mxu0 %v257
        %288 = vmatprep.subr.mxu0 0.0
        %289 = vmatpush1.msra.mxu0 %v258
        %290 = vmatprep.subr.mxu0 0.0
        %291 = vmatpush1.msra.mxu0 %v259
        %292 = vmatprep.subr.mxu0 0.0
        %293 = vmatpush1.msra.mxu0 %v260
        %294 = vmatprep.subr.mxu0 0.0
        %295 = vmatpush1.msra.mxu0 %v261
        %296 = vmatprep.subr.mxu0 0.0
        %297 = vmatpush1.msra.mxu0 %v262
        %298 = vmatprep.subr.mxu0 0.0
        %299 = vmatpush1.msra.mxu0 %v263
        %300 = vmatprep.subr.mxu0 0.0
        %301 = vmatpush1.msra.mxu0 %v264
        %302 = vmatprep.subr.mxu0 0.0
        %303 = vmatpush1.msra.mxu0 %v265
        %304 = vmatprep.subr.mxu0 0.0
        %305 = vmatpush1.msra.mxu0 %v266
        %306 = vmatprep.subr.mxu0 0.0
        %307 = vmatpush1.msra.mxu0 0.0
        %308 = vmatprep.subr.mxu0 0.0
        %309 = vmatpush1.msra.mxu0 0.0
        %310 = vmatprep.subr.mxu0 0.0
        %311 = vmatpush1.msra.mxu0 0.0
        %312 = vmatprep.subr.mxu0 0.0
        %313 = vmatpush1.msra.mxu0 0.0
        %314 = vmatprep.subr.mxu0 0.0
        %315 = vmatpush1.msra.mxu0 0.0
        %316 = vmatprep.subr.mxu0 0.0
        %317 = vmatpush1.msra.mxu0 0.0
        %318 = vmatprep.subr.mxu0 0.0
        %319 = vmatpush1.msra.mxu0 0.0
        %320 = vmatprep.subr.mxu0 0.0
        %321 = vmatpush1.msra.mxu0 0.0
        %322 = vmatprep.subr.mxu0 0.0
        %323 = vmatpush1.msra.mxu0 0.0
        %324 = vmatprep.subr.mxu0 0.0
        %325 = vmatpush1.msra.mxu0 0.0
        %326 = vmatprep.subr.mxu0 0.0
        %327 = vmatpush1.msra.mxu0 0.0
        %328 = vmatprep.subr.mxu0 0.0
        %329 = vmatpush1.msra.mxu0 0.0
        %330 = vmatprep.subr.mxu0 0.0
        %331 = vmatpush1.msra.mxu0 0.0
        %332 = vmatprep.subr.mxu0 0.0
        %333 = vmatpush1.msra.mxu0 0.0
        %334 = vmatprep.subr.mxu0 0.0
        %335 = vmatpush1.msra.mxu0 0.0
        %336 = vmatprep.subr.mxu0 0.0
        %337 = vmatpush1.msra.mxu0 0.0
        %338 = vmatprep.mubr.f32.mxu0 0.0
        %339 = vmatmul.mubr.f32.gmra.mrb[0].mxu0 %v250
        %v340 = vpop.f32.mrb[0].mxu0
        %v341 = vadd.f32 %v272, %v340
        %v342 = vpop.f32.mrb[0].mxu0
        %343 = vdwg.mxu0
        %vm344 = vcmp.gt.f32.partialorder %v341, 0.0
        %v345 = vmin.f32 %v341, 0.0
        %v346 = vmul.f32 %v345, 1.442695
        %v347 = vpow.pop %v346
        %v348 = vsub.f32 %v347, 1.0
        %v349 = vmul.f32 %v348, 1.6732632
        %v350 = vsel %vm344, %v341, %v349
        %v351 = vmul.f32 %v350, 1.050701
        %v352 = vld [vmem:[#allocation4] sm:$0xff]
        %v353 = vld [vmem:[#allocation4 + $0x8] sm:$0xff]
        %v354 = vld [vmem:[#allocation4 + $0x10] sm:$0xff]
        %v355 = vld [vmem:[#allocation4 + $0x18] sm:$0xff]
        %v356 = vld [vmem:[#allocation4 + $0x20] sm:$0xff]
        %v357 = vld [vmem:[#allocation4 + $0x28] sm:$0xff]
        %v358 = vld [vmem:[#allocation4 + $0x30] sm:$0xff]
        %v359 = vld [vmem:[#allocation4 + $0x38] sm:$0xff]
        %v360 = vld [vmem:[#allocation4 + $0x40] sm:$0xff]
        %v361 = vld [vmem:[#allocation4 + $0x48] sm:$0xff]
        %v362 = vld [vmem:[#allocation4 + $0x50] sm:$0xff]
        %v363 = vld [vmem:[#allocation4 + $0x58] sm:$0xff]
        %v364 = vld [vmem:[#allocation4 + $0x60] sm:$0xff]
        %v365 = vld [vmem:[#allocation4 + $0x68] sm:$0xff]
        %v366 = vld [vmem:[#allocation4 + $0x70] sm:$0xff]
        %v367 = vld [vmem:[#allocation4 + $0x78] sm:$0xff]
        %v368 = vld [vmem:[%s4] sm:$0x1]
        %v370 = vlaneseq
        %v371 = vshrl.u32 %v370, 7
        %v372 = vsub.s32 0, %v371
        %v373 = vrot.slane %v368, %v372
        %375 = vmatprep.subr.mxu0 0.0
        %376 = vmatpush1.msra.mxu0 %v352
        %377 = vmatprep.subr.mxu0 0.0
        %378 = vmatpush1.msra.mxu0 %v353
        %379 = vmatprep.subr.mxu0 0.0
        %380 = vmatpush1.msra.mxu0 %v354
        %381 = vmatprep.subr.mxu0 0.0
        %382 = vmatpush1.msra.mxu0 %v355
        %383 = vmatprep.subr.mxu0 0.0
        %384 = vmatpush1.msra.mxu0 %v356
        %385 = vmatprep.subr.mxu0 0.0
        %386 = vmatpush1.msra.mxu0 %v357
        %387 = vmatprep.subr.mxu0 0.0
        %388 = vmatpush1.msra.mxu0 %v358
        %389 = vmatprep.subr.mxu0 0.0
        %390 = vmatpush1.msra.mxu0 %v359
        %391 = vmatprep.subr.mxu0 0.0
        %392 = vmatpush1.msra.mxu0 %v360
        %393 = vmatprep.subr.mxu0 0.0
        %394 = vmatpush1.msra.mxu0 %v361
        %395 = vmatprep.subr.mxu0 0.0
        %396 = vmatpush1.msra.mxu0 %v362
        %397 = vmatprep.subr.mxu0 0.0
        %398 = vmatpush1.msra.mxu0 %v363
        %399 = vmatprep.subr.mxu0 0.0
        %400 = vmatpush1.msra.mxu0 %v364
        %401 = vmatprep.subr.mxu0 0.0
        %402 = vmatpush1.msra.mxu0 %v365
        %403 = vmatprep.subr.mxu0 0.0
        %404 = vmatpush1.msra.mxu0 %v366
        %405 = vmatprep.subr.mxu0 0.0
        %406 = vmatpush1.msra.mxu0 %v367
        %407 = vmatprep.subr.mxu0 0.0
        %408 = vmatpush1.msra.mxu0 0.0
        %409 = vmatprep.subr.mxu0 0.0
        %410 = vmatpush1.msra.mxu0 0.0
        %411 = vmatprep.subr.mxu0 0.0
        %412 = vmatpush1.msra.mxu0 0.0
        %413 = vmatprep.subr.mxu0 0.0
        %414 = vmatpush1.msra.mxu0 0.0
        %415 = vmatprep.subr.mxu0 0.0
        %416 = vmatpush1.msra.mxu0 0.0
        %417 = vmatprep.subr.mxu0 0.0
        %418 = vmatpush1.msra.mxu0 0.0
        %419 = vmatprep.subr.mxu0 0.0
        %420 = vmatpush1.msra.mxu0 0.0
        %421 = vmatprep.subr.mxu0 0.0
        %422 = vmatpush1.msra.mxu0 0.0
        %423 = vmatprep.subr.mxu0 0.0
        %424 = vmatpush1.msra.mxu0 0.0
        %425 = vmatprep.subr.mxu0 0.0
        %426 = vmatpush1.msra.mxu0 0.0
        %427 = vmatprep.subr.mxu0 0.0
        %428 = vmatpush1.msra.mxu0 0.0
        %429 = vmatprep.subr.mxu0 0.0
        %430 = vmatpush1.msra.mxu0 0.0
        %431 = vmatprep.subr.mxu0 0.0
        %432 = vmatpush1.msra.mxu0 0.0
        %433 = vmatprep.subr.mxu0 0.0
        %434 = vmatpush1.msra.mxu0 0.0
        %435 = vmatprep.subr.mxu0 0.0
        %436 = vmatpush1.msra.mxu0 0.0
        %437 = vmatprep.subr.mxu0 0.0
        %438 = vmatpush1.msra.mxu0 0.0
        %439 = vmatprep.mubr.f32.mxu0 0.0
        %440 = vmatmul.mubr.f32.gmra.mrb[0].mxu0 %v351
        %v441 = vpop.f32.mrb[0].mxu0
        %v442 = vadd.f32 %v373, %v441
        %v443 = vpop.f32.mrb[0].mxu0
        %444 = vdwg.mxu0
        %445 = vst [vmem:[%s249] sm:$0xff] %v442
        %p446 = scmp.lt.s32.totalorder %s18, 2
        %s447 = scalar_select %p446, %s18, 2
        %s448 = smul.addr %s447, 8
        %s449 = scalar_lea.vmem %s5, %s448
        // Predicated region
        $region49: #{mlp_forward.1} parent=39 // pred_check
          %p450 = pneg %p146
        $region50: #{mlp_forward.1} parent=39 // pred_check_branch
          %452 = sbr.rel (%p450) target = $region52
        $region51: #{mlp_forward.1} parent=39 // pred_region
          _
        $region52: #{mlp_forward.1} parent=39 // pred_fallthru
          _
      $region40: #{mlp_forward.1} parent=5 // pred_fallthru
        _
      %p453 = scmp.le.s32.totalorder 2, %s13
      // Predicated region
      $region53: #{mlp_forward.1} parent=5 // pred_check
        %p454 = pneg %p453
      $region54: #{mlp_forward.1} parent=5 // pred_check_branch
        %456 = sbr.rel (%p454) target = $region56
      $region55: #{mlp_forward.1} parent=5 // pred_region
        %s457 = ssub.s32 %s13, 2
        // Predicated region
        $region57: #{mlp_forward.1} parent=55 // pred_check
          %p458 = pneg %p152
        $region58: #{mlp_forward.1} parent=55 // pred_check_branch
          %460 = sbr.rel (%p458) target = $region60
        $region59: #{mlp_forward.1} parent=55 // pred_region
          %p461 = scmp.lt.s32.totalorder %s19, 2
          %s462 = scalar_select %p461, %s19, 2
          %s463 = smul.addr %s462, 8
          %s464 = scalar_lea.vmem %s5, %s463
        $region60: #{mlp_forward.1} parent=55 // pred_fallthru
          _
      $region56: #{mlp_forward.1} parent=5 // pred_fallthru
        _
    $region6: #{mlp_forward.1} parent=1 // loop_footer
      %s17 = sadd.s32 1, %s13
    $region7: #{mlp_forward.1} parent=1 // loop_footer_branch
      %12 = sbr.rel target = $region3
    $region8: #{mlp_forward.1} parent=1 // loop_exit
      _
    %465 = vsyncpa [#allocation3], 1
    %s466 = scalar_lea.sflag [#allocation3], 1
    %467 = vsyncpa %s466, 1
    %468 = vsyncpa [#allocation5], 1

</llo_original>
